<compile_context>
chip_gen: v5e
topology: v5e:2x2
jax: 0.10.0
libtpu: 0.0.40
codegen_flags: <defaults>
</compile_context>

<pallas_src>
import functools

import jax
import jax.numpy as jnp
from jax.experimental import pallas as pl
from jax.experimental.pallas import tpu as pltpu

# ----- sizes -------------------------------------------------------------
F_IN = 25                 # true input / output feature dim
H1, H2, H3 = 64, 256, 64  # hidden dims (kept unpadded)
P_IN, P_OUT = 128, 128    # lane-padded input / output feature dims
EPS = 1e-6                # F.pairwise_distance default eps


def _siamese_kernel(x1_ref, x2_ref,
                    w1_ref, b1_ref, w2_ref, b2_ref,
                    w3_ref, b3_ref, w4_ref, b4_ref,
                    out_ref):
    tb = x1_ref.shape[0]
    # Fuse the two towers: one (2*TB)-row matmul chain instead of two TB-row ones.
    xx = jnp.concatenate([x1_ref[...], x2_ref[...]], axis=0)         # (2TB, 128)

    h = jax.nn.sigmoid(
        jnp.dot(xx, w1_ref[...], preferred_element_type=jnp.float32) + b1_ref[...])
    h = jax.nn.sigmoid(
        jnp.dot(h, w2_ref[...], preferred_element_type=jnp.float32) + b2_ref[...])
    h = jax.nn.sigmoid(
        jnp.dot(h, w3_ref[...], preferred_element_type=jnp.float32) + b3_ref[...])
    o = jnp.dot(h, w4_ref[...], preferred_element_type=jnp.float32) + b4_ref[...]  # (2TB, 128)

    # F.pairwise_distance: || (o1 - o2) + eps ||_2 over the last dim, keepdim.
    # Output lanes >= F_IN are padding (zero weight cols / zero bias) -> masked.
    diff = (o[:tb] - o[tb:]) + EPS
    lane = jax.lax.broadcasted_iota(jnp.int32, diff.shape, dimension=1)
    sq = jnp.where(lane < F_IN, diff * diff, 0.0)
    dist = jnp.sqrt(jnp.sum(sq, axis=-1, keepdims=True))             # (TB, 1)
    out_ref[...] = jnp.broadcast_to(dist, out_ref.shape)             # lane-dense store


def _round_up(x, m):
    return (x + m - 1) // m * m


def prepare_params(params):
    """Pad weights ONCE (not per forward call).

    Only W1's input rows (25 -> 128) and W4's output cols / b4 (25 -> 128) are
    padded; hidden dims stay at 64 / 256 / 64.
    """
    (w1, b1), (w2, b2), (w3, b3), (w4, b4) = params
    w1p = jnp.pad(w1.astype(jnp.float32), ((0, P_IN - F_IN), (0, 0)))   # (128, 64)
    w4p = jnp.pad(w4.astype(jnp.float32), ((0, 0), (0, P_OUT - F_IN)))  # (64, 128)
    b4p = jnp.pad(b4.astype(jnp.float32), (0, P_OUT - F_IN))            # (128,)
    return (w1p, b1.astype(jnp.float32).reshape(1, H1),
            w2.astype(jnp.float32), b2.astype(jnp.float32).reshape(1, H2),
            w3.astype(jnp.float32), b3.astype(jnp.float32).reshape(1, H3),
            w4p, b4p.reshape(1, P_OUT))


def siamese_forward(input1, input2, padded_params):
    """input1, input2: (B, 25) float32. Returns (B, 1) pairwise L2 distance."""
    B = input1.shape[0]
    TB = min(256, _round_up(B, 8))       # batch tile (sublane-aligned)
    B_pad = _round_up(B, TB)

    x1 = jnp.pad(input1.astype(jnp.float32), ((0, B_pad - B), (0, P_IN - F_IN)))
    x2 = jnp.pad(input2.astype(jnp.float32), ((0, B_pad - B), (0, P_IN - F_IN)))

    batch_map = lambda i: (i, 0)
    const_map = lambda i: (0, 0)
    in_specs = [
        pl.BlockSpec((TB, P_IN), batch_map),    # x1
        pl.BlockSpec((TB, P_IN), batch_map),    # x2
        pl.BlockSpec((P_IN, H1), const_map),    # w1 (VMEM-resident across tiles)
        pl.BlockSpec((1, H1), const_map),       # b1
        pl.BlockSpec((H1, H2), const_map),      # w2
        pl.BlockSpec((1, H2), const_map),       # b2
        pl.BlockSpec((H2, H3), const_map),      # w3
        pl.BlockSpec((1, H3), const_map),       # b3
        pl.BlockSpec((H3, P_OUT), const_map),   # w4
        pl.BlockSpec((1, P_OUT), const_map),    # b4
    ]

    out = pl.pallas_call(
        _siamese_kernel,
        out_shape=jax.ShapeDtypeStruct((B_pad, P_OUT), jnp.float32),
        grid=(B_pad // TB,),
        in_specs=in_specs,
        out_specs=pl.BlockSpec((TB, P_OUT), batch_map),
        compiler_params=pltpu.CompilerParams(
            dimension_semantics=("parallel",)),
    )(x1, x2, *padded_params)
    return out[:B, :1]   # keepdim=True -> (B, 1)


def init_params(key):
    """Deterministic init mimicking nn.Linear default (U(-1/sqrt(fan_in), ...))."""
    dims = [(F_IN, H1), (H1, H2), (H2, H3), (H3, F_IN)]
    params = []
    for (fan_in, fan_out) in dims:
        key, kw, kb = jax.random.split(key, 3)
        bound = 1.0 / jnp.sqrt(fan_in)
        w = jax.random.uniform(kw, (fan_in, fan_out), jnp.float32, -bound, bound)
        b = jax.random.uniform(kb, (fan_out,), jnp.float32, -bound, bound)
        params.append((w, b))
    return params


def _reference(input1, input2, params):
    def mlp(x):
        (w1, b1), (w2, b2), (w3, b3), (w4, b4) = params
        h = jax.nn.sigmoid(x @ w1 + b1)
        h = jax.nn.sigmoid(h @ w2 + b2)
        h = jax.nn.sigmoid(h @ w3 + b3)
        return h @ w4 + b4
    d = mlp(input1) - mlp(input2) + EPS
    return jnp.sqrt(jnp.sum(d * d, axis=-1, keepdims=True))


if __name__ == "__main__":
    key = jax.random.PRNGKey(0)
    kp, k1, k2 = jax.random.split(key, 3)
    params = init_params(kp)
    padded_params = prepare_params(params)   # pad weights once, reuse per call

    B = 8
    input1 = jax.random.normal(k1, (B, F_IN), jnp.float32)
    input2 = jax.random.normal(k2, (B, F_IN), jnp.float32)

    fwd = jax.jit(siamese_forward)
    out = fwd(input1, input2, padded_params)
    out = jax.block_until_ready(out)

    ref = _reference(input1, input2, params)
    assert out.shape == (B, 1), out.shape
    assert jnp.allclose(out, ref, rtol=1e-4, atol=1e-5), (out, ref)
    print("KERNEL_OK")
</pallas_src>

<mosaic_0001>
module attributes {stable_mosaic.version = 11 : i64} {
  func.func @_siamese_kernel(%arg0: i32, %arg1: memref<8x128xf32, #tpu.memory_space<vmem>>, %arg2: memref<8x128xf32, #tpu.memory_space<vmem>>, %arg3: memref<128x64xf32, #tpu.memory_space<vmem>>, %arg4: memref<1x64xf32, #tpu.memory_space<vmem>>, %arg5: memref<64x256xf32, #tpu.memory_space<vmem>>, %arg6: memref<1x256xf32, #tpu.memory_space<vmem>>, %arg7: memref<256x64xf32, #tpu.memory_space<vmem>>, %arg8: memref<1x64xf32, #tpu.memory_space<vmem>>, %arg9: memref<64x128xf32, #tpu.memory_space<vmem>>, %arg10: memref<1x128xf32, #tpu.memory_space<vmem>>, %arg11: memref<8x128xf32, #tpu.memory_space<vmem>>) attributes {dimension_semantics = [#tpu.dimension_semantics<parallel>], iteration_bounds = array<i64: 1>, scalar_prefetch = 0 : i64, scratch_operands = 0 : i64, tpu.core_type = #tpu.core_type<tc>, window_params = [{transform_indices = @transform_0, window_bounds = array<i64: 8, 128>}, {transform_indices = @transform_1, window_bounds = array<i64: 8, 128>}, {pipeline_mode = #tpu.pipeline_mode<synchronous>, transform_indices = @transform_2, window_bounds = array<i64: 128, 64>}, {pipeline_mode = #tpu.pipeline_mode<synchronous>, transform_indices = @transform_3, window_bounds = array<i64: 1, 64>}, {pipeline_mode = #tpu.pipeline_mode<synchronous>, transform_indices = @transform_4, window_bounds = array<i64: 64, 256>}, {pipeline_mode = #tpu.pipeline_mode<synchronous>, transform_indices = @transform_5, window_bounds = array<i64: 1, 256>}, {pipeline_mode = #tpu.pipeline_mode<synchronous>, transform_indices = @transform_6, window_bounds = array<i64: 256, 64>}, {pipeline_mode = #tpu.pipeline_mode<synchronous>, transform_indices = @transform_7, window_bounds = array<i64: 1, 64>}, {pipeline_mode = #tpu.pipeline_mode<synchronous>, transform_indices = @transform_8, window_bounds = array<i64: 64, 128>}, {pipeline_mode = #tpu.pipeline_mode<synchronous>, transform_indices = @transform_9, window_bounds = array<i64: 1, 128>}, {transform_indices = @transform_10, window_bounds = array<i64: 8, 128>}]} {
    %c0 = arith.constant 0 : index
    %c0_0 = arith.constant 0 : index
    %0 = vector.load %arg1[%c0, %c0_0] : memref<8x128xf32, #tpu.memory_space<vmem>>, vector<8x128xf32>
    %c0_1 = arith.constant 0 : index
    %c0_2 = arith.constant 0 : index
    %1 = vector.load %arg2[%c0_1, %c0_2] : memref<8x128xf32, #tpu.memory_space<vmem>>, vector<8x128xf32>
    %2 = tpu.concatenate %0, %1 in 0 : vector<8x128xf32>, vector<8x128xf32> -> vector<16x128xf32>
    %c0_3 = arith.constant 0 : index
    %c0_4 = arith.constant 0 : index
    %3 = vector.load %arg3[%c0_3, %c0_4] : memref<128x64xf32, #tpu.memory_space<vmem>>, vector<128x64xf32>
    %cst = arith.constant dense<0.000000e+00> : vector<16x64xf32>
    %4 = tpu.matmul %2, %3, %cst {dimension_numbers = #tpu.dot_dimension_numbers<[1], [0], [0], [1], [0, 0, 1, 1], [], []>} : vector<16x128xf32>, vector<128x64xf32>, vector<16x64xf32> -> vector<16x64xf32>
    %c0_5 = arith.constant 0 : index
    %c0_6 = arith.constant 0 : index
    %5 = vector.load %arg4[%c0_5, %c0_6] : memref<1x64xf32, #tpu.memory_space<vmem>>, vector<1x64xf32>
    %6 = vector.broadcast %5 : vector<1x64xf32> to vector<16x64xf32>
    %7 = arith.addf %4, %6 : vector<16x64xf32>
    %8 = arith.negf %7 : vector<16x64xf32>
    %9 = math.exp %8 : vector<16x64xf32>
    %cst_7 = arith.constant 1.000000e+00 : f32
    %10 = vector.broadcast %cst_7 : f32 to vector<16x64xf32>
    %11 = arith.addf %10, %9 : vector<16x64xf32>
    %12 = arith.divf %10, %11 : vector<16x64xf32>
    %c0_8 = arith.constant 0 : index
    %c0_9 = arith.constant 0 : index
    %13 = vector.load %arg5[%c0_8, %c0_9] : memref<64x256xf32, #tpu.memory_space<vmem>>, vector<64x256xf32>
    %cst_10 = arith.constant dense<0.000000e+00> : vector<16x256xf32>
    %14 = tpu.matmul %12, %13, %cst_10 {dimension_numbers = #tpu.dot_dimension_numbers<[1], [0], [0], [1], [0, 0, 1, 1], [], []>} : vector<16x64xf32>, vector<64x256xf32>, vector<16x256xf32> -> vector<16x256xf32>
    %c0_11 = arith.constant 0 : index
    %c0_12 = arith.constant 0 : index
    %15 = vector.load %arg6[%c0_11, %c0_12] : memref<1x256xf32, #tpu.memory_space<vmem>>, vector<1x256xf32>
    %16 = vector.broadcast %15 : vector<1x256xf32> to vector<16x256xf32>
    %17 = arith.addf %14, %16 : vector<16x256xf32>
    %18 = arith.negf %17 : vector<16x256xf32>
    %19 = math.exp %18 : vector<16x256xf32>
    %cst_13 = arith.constant 1.000000e+00 : f32
    %20 = vector.broadcast %cst_13 : f32 to vector<16x256xf32>
    %21 = arith.addf %20, %19 : vector<16x256xf32>
    %22 = arith.divf %20, %21 : vector<16x256xf32>
    %c0_14 = arith.constant 0 : index
    %c0_15 = arith.constant 0 : index
    %23 = vector.load %arg7[%c0_14, %c0_15] : memref<256x64xf32, #tpu.memory_space<vmem>>, vector<256x64xf32>
    %cst_16 = arith.constant dense<0.000000e+00> : vector<16x64xf32>
    %24 = tpu.matmul %22, %23, %cst_16 {dimension_numbers = #tpu.dot_dimension_numbers<[1], [0], [0], [1], [0, 0, 1, 1], [], []>} : vector<16x256xf32>, vector<256x64xf32>, vector<16x64xf32> -> vector<16x64xf32>
    %c0_17 = arith.constant 0 : index
    %c0_18 = arith.constant 0 : index
    %25 = vector.load %arg8[%c0_17, %c0_18] : memref<1x64xf32, #tpu.memory_space<vmem>>, vector<1x64xf32>
    %26 = vector.broadcast %25 : vector<1x64xf32> to vector<16x64xf32>
    %27 = arith.addf %24, %26 : vector<16x64xf32>
    %28 = arith.negf %27 : vector<16x64xf32>
    %29 = math.exp %28 : vector<16x64xf32>
    %cst_19 = arith.constant 1.000000e+00 : f32
    %30 = vector.broadcast %cst_19 : f32 to vector<16x64xf32>
    %31 = arith.addf %30, %29 : vector<16x64xf32>
    %32 = arith.divf %30, %31 : vector<16x64xf32>
    %c0_20 = arith.constant 0 : index
    %c0_21 = arith.constant 0 : index
    %33 = vector.load %arg9[%c0_20, %c0_21] : memref<64x128xf32, #tpu.memory_space<vmem>>, vector<64x128xf32>
    %cst_22 = arith.constant dense<0.000000e+00> : vector<16x128xf32>
    %34 = tpu.matmul %32, %33, %cst_22 {dimension_numbers = #tpu.dot_dimension_numbers<[1], [0], [0], [1], [0, 0, 1, 1], [], []>} : vector<16x64xf32>, vector<64x128xf32>, vector<16x128xf32> -> vector<16x128xf32>
    %c0_23 = arith.constant 0 : index
    %c0_24 = arith.constant 0 : index
    %35 = vector.load %arg10[%c0_23, %c0_24] : memref<1x128xf32, #tpu.memory_space<vmem>>, vector<1x128xf32>
    %36 = vector.broadcast %35 : vector<1x128xf32> to vector<16x128xf32>
    %37 = arith.addf %34, %36 : vector<16x128xf32>
    %38 = vector.extract_strided_slice %37 {offsets = [0, 0], sizes = [8, 128], strides = [1, 1]} : vector<16x128xf32> to vector<8x128xf32>
    %39 = vector.extract_strided_slice %37 {offsets = [8, 0], sizes = [8, 128], strides = [1, 1]} : vector<16x128xf32> to vector<8x128xf32>
    %40 = arith.subf %38, %39 : vector<8x128xf32>
    %cst_25 = arith.constant 9.99999997E-7 : f32
    %41 = vector.broadcast %cst_25 : f32 to vector<8x128xf32>
    %42 = arith.addf %40, %41 : vector<8x128xf32>
    %43 = tpu.iota {dimensions = array<i32: 1>} : vector<8x128xi32>
    %c25_i32 = arith.constant 25 : i32
    %44 = vector.broadcast %c25_i32 : i32 to vector<8x128xi32>
    %45 = arith.cmpi slt, %43, %44 : vector<8x128xi32>
    %46 = arith.mulf %42, %42 : vector<8x128xf32>
    %cst_26 = arith.constant 0.000000e+00 : f32
    %47 = vector.broadcast %cst_26 : f32 to vector<8x128xf32>
    %48 = arith.select %45, %46, %47 : vector<8x128xi1>, vector<8x128xf32>
    %cst_27 = arith.constant dense<0.000000e+00> : vector<8xf32>
    %49 = vector.multi_reduction <add>, %48, %cst_27 [1] : vector<8x128xf32> to vector<8xf32>
    %50 = vector.shape_cast %49 : vector<8xf32> to vector<8x1xf32>
    %51 = math.sqrt %50 : vector<8x1xf32>
    %52 = vector.shape_cast %51 : vector<8x1xf32> to vector<8x1xf32>
    %53 = vector.broadcast %52 : vector<8x1xf32> to vector<8x128xf32>
    %c0_28 = arith.constant 0 : index
    %c0_29 = arith.constant 0 : index
    %54 = vector.load %arg11[%c0_28, %c0_29] : memref<8x128xf32, #tpu.memory_space<vmem>>, vector<8x128xf32>
    tpu.vector_store %arg11[%c0_28, %c0_29], %53 {strides = array<i32>} : memref<8x128xf32, #tpu.memory_space<vmem>>, vector<8x128xf32>,
    return
  }
  func.func @transform_0(%arg0: i32) -> (i32, i32) {
    %c0_i32 = arith.constant 0 : i32
    %c0_i32_0 = arith.constant 0 : i32
    return %arg0, %c0_i32 : i32, i32
  }
  func.func @transform_1(%arg0: i32) -> (i32, i32) {
    %c0_i32 = arith.constant 0 : i32
    %c0_i32_0 = arith.constant 0 : i32
    return %arg0, %c0_i32 : i32, i32
  }
  func.func @transform_2(%arg0: i32) -> (i32, i32) {
    %c0_i32 = arith.constant 0 : i32
    %c0_i32_0 = arith.constant 0 : i32
    %c0_i32_1 = arith.constant 0 : i32
    return %c0_i32, %c0_i32_0 : i32, i32
  }
  func.func @transform_3(%arg0: i32) -> (i32, i32) {
    %c0_i32 = arith.constant 0 : i32
    %c0_i32_0 = arith.constant 0 : i32
    %c0_i32_1 = arith.constant 0 : i32
    return %c0_i32, %c0_i32_0 : i32, i32
  }
  func.func @transform_4(%arg0: i32) -> (i32, i32) {
    %c0_i32 = arith.constant 0 : i32
    %c0_i32_0 = arith.constant 0 : i32
    %c0_i32_1 = arith.constant 0 : i32
    return %c0_i32, %c0_i32_0 : i32, i32
  }
  func.func @transform_5(%arg0: i32) -> (i32, i32) {
    %c0_i32 = arith.constant 0 : i32
    %c0_i32_0 = arith.constant 0 : i32
    %c0_i32_1 = arith.constant 0 : i32
    return %c0_i32, %c0_i32_0 : i32, i32
  }
  func.func @transform_6(%arg0: i32) -> (i32, i32) {
    %c0_i32 = arith.constant 0 : i32
    %c0_i32_0 = arith.constant 0 : i32
    %c0_i32_1 = arith.constant 0 : i32
    return %c0_i32, %c0_i32_0 : i32, i32
  }
  func.func @transform_7(%arg0: i32) -> (i32, i32) {
    %c0_i32 = arith.constant 0 : i32
    %c0_i32_0 = arith.constant 0 : i32
    %c0_i32_1 = arith.constant 0 : i32
    return %c0_i32, %c0_i32_0 : i32, i32
  }
  func.func @transform_8(%arg0: i32) -> (i32, i32) {
    %c0_i32 = arith.constant 0 : i32
    %c0_i32_0 = arith.constant 0 : i32
    %c0_i32_1 = arith.constant 0 : i32
    return %c0_i32, %c0_i32_0 : i32, i32
  }
  func.func @transform_9(%arg0: i32) -> (i32, i32) {
    %c0_i32 = arith.constant 0 : i32
    %c0_i32_0 = arith.constant 0 : i32
    %c0_i32_1 = arith.constant 0 : i32
    return %c0_i32, %c0_i32_0 : i32, i32
  }
  func.func @transform_10(%arg0: i32) -> (i32, i32) {
    %c0_i32 = arith.constant 0 : i32
    %c0_i32_0 = arith.constant 0 : i32
    return %arg0, %c0_i32 : i32, i32
  }
}

</mosaic_0001>

<llo_original>
// kernel: siamese_forward.1
$region0: #{siamese_forward.1}
  #allocation0 [shape = 'u32[]', space=smem, size = 0x4, offset = 0x4, fixed_abs, tag = 'smem constant byte address 0x4 - core index']
  #allocation1 [shape = 'u32[72,128]{1,0:T(1,128)}', space=vmem, size = 0x9000, scoped, tag = 'internal scratch']
  %s0 = inlined_call_operand.vmem [shape: f32[8,128], index: 0, kind: input, shape index: {}]
  %s1 = inlined_call_operand.vmem [shape: f32[8,128], index: 1, kind: input, shape index: {}]
  %s2 = inlined_call_operand.vmem [shape: f32[128,64], index: 2, kind: input, shape index: {}]
  %s3 = inlined_call_operand.vmem [shape: f32[1,64], index: 3, kind: input, shape index: {}]
  %s4 = inlined_call_operand.vmem [shape: f32[64,256], index: 4, kind: input, shape index: {}]
  %s5 = inlined_call_operand.vmem [shape: f32[1,256], index: 5, kind: input, shape index: {}]
  %s6 = inlined_call_operand.vmem [shape: f32[256,64], index: 6, kind: input, shape index: {}]
  %s7 = inlined_call_operand.vmem [shape: f32[1,64], index: 7, kind: input, shape index: {}]
  %s8 = inlined_call_operand.vmem [shape: f32[64,128], index: 8, kind: input, shape index: {}]
  %s9 = inlined_call_operand.vmem [shape: f32[1,128], index: 9, kind: input, shape index: {}]
  %s10 = inlined_call_operand.vmem [shape: f32[8,128], index: 10, kind: output, shape index: {}]
  %s11 = sld [smem:[#allocation0]]
  $region50: #{siamese_forward.1} parent=0
    _
  %s13 = ssub.s32 1, %s11
  %s14 = scalar_select 0, %s13, %s11
  // Predicated region
  $region2: #{siamese_forward.1} parent=0 // pred_check
    _
  $region3: #{siamese_forward.1} parent=0 // pred_check_branch
    %16 = sbr.rel (0) target = $region5
  $region4: #{siamese_forward.1} parent=0 // pred_region
    _
  $region5: #{siamese_forward.1} parent=0 // pred_fallthru
    _
  // Predicated region
  $region6: #{siamese_forward.1} parent=0 // pred_check
    _
  $region7: #{siamese_forward.1} parent=0 // pred_check_branch
    %18 = sbr.rel (0) target = $region9
  $region8: #{siamese_forward.1} parent=0 // pred_region
    _
  $region9: #{siamese_forward.1} parent=0 // pred_fallthru
    _
  // Predicated region
  $region10: #{siamese_forward.1} parent=0 // pred_check
    _
  $region11: #{siamese_forward.1} parent=0 // pred_check_branch
    %20 = sbr.rel (0) target = $region13
  $region12: #{siamese_forward.1} parent=0 // pred_region
    _
  $region13: #{siamese_forward.1} parent=0 // pred_fallthru
    _
  // Predicated region
  $region14: #{siamese_forward.1} parent=0 // pred_check
    _
  $region15: #{siamese_forward.1} parent=0 // pred_check_branch
    %22 = sbr.rel (0) target = $region17
  $region16: #{siamese_forward.1} parent=0 // pred_region
    _
  $region17: #{siamese_forward.1} parent=0 // pred_fallthru
    _
  // Predicated region
  $region18: #{siamese_forward.1} parent=0 // pred_check
    _
  $region19: #{siamese_forward.1} parent=0 // pred_check_branch
    %24 = sbr.rel (0) target = $region21
  $region20: #{siamese_forward.1} parent=0 // pred_region
    _
  $region21: #{siamese_forward.1} parent=0 // pred_fallthru
    _
  // Predicated region
  $region22: #{siamese_forward.1} parent=0 // pred_check
    _
  $region23: #{siamese_forward.1} parent=0 // pred_check_branch
    %26 = sbr.rel (0) target = $region25
  $region24: #{siamese_forward.1} parent=0 // pred_region
    _
  $region25: #{siamese_forward.1} parent=0 // pred_fallthru
    _
  // Predicated region
  $region26: #{siamese_forward.1} parent=0 // pred_check
    _
  $region27: #{siamese_forward.1} parent=0 // pred_check_branch
    %28 = sbr.rel (0) target = $region29
  $region28: #{siamese_forward.1} parent=0 // pred_region
    _
  $region29: #{siamese_forward.1} parent=0 // pred_fallthru
    _
  // Predicated region
  $region30: #{siamese_forward.1} parent=0 // pred_check
    _
  $region31: #{siamese_forward.1} parent=0 // pred_check_branch
    %30 = sbr.rel (0) target = $region33
  $region32: #{siamese_forward.1} parent=0 // pred_region
    _
  $region33: #{siamese_forward.1} parent=0 // pred_fallthru
    _
  // Predicated region
  $region34: #{siamese_forward.1} parent=0 // pred_check
    _
  $region35: #{siamese_forward.1} parent=0 // pred_check_branch
    %32 = sbr.rel (0) target = $region37
  $region36: #{siamese_forward.1} parent=0 // pred_region
    _
  $region37: #{siamese_forward.1} parent=0 // pred_fallthru
    _
  // Predicated region
  $region38: #{siamese_forward.1} parent=0 // pred_check
    _
  $region39: #{siamese_forward.1} parent=0 // pred_check_branch
    %34 = sbr.rel (0) target = $region41
  $region40: #{siamese_forward.1} parent=0 // pred_region
    _
  $region41: #{siamese_forward.1} parent=0 // pred_fallthru
    _
  %v35 = vld [vmem:[%s0] sm:$0xff]
  %v36 = vld [vmem:[%s1] sm:$0xff]
  %v37 = vld [vmem:[%s2] sm:$0xff]
  %v38 = vld [vmem:[%s2 + $0x8] sm:$0xff]
  %v39 = vld [vmem:[%s2 + $0x10] sm:$0xff]
  %v40 = vld [vmem:[%s2 + $0x18] sm:$0xff]
  %v41 = vld [vmem:[%s2 + $0x20] sm:$0xff]
  %v42 = vld [vmem:[%s2 + $0x28] sm:$0xff]
  %v43 = vld [vmem:[%s2 + $0x30] sm:$0xff]
  %v44 = vld [vmem:[%s2 + $0x38] sm:$0xff]
  %v45 = vld [vmem:[%s2 + $0x40] sm:$0xff]
  %v46 = vld [vmem:[%s2 + $0x48] sm:$0xff]
  %v47 = vld [vmem:[%s2 + $0x50] sm:$0xff]
  %v48 = vld [vmem:[%s2 + $0x58] sm:$0xff]
  %v49 = vld [vmem:[%s2 + $0x60] sm:$0xff]
  %v50 = vld [vmem:[%s2 + $0x68] sm:$0xff]
  %v51 = vld [vmem:[%s2 + $0x70] sm:$0xff]
  %v52 = vld [vmem:[%s2 + $0x78] sm:$0xff]
  %v53 = vld [vmem:[%s3] sm:$0x1]
  %v55 = vperm.slane %v53, 0
  %57 = vmatpush.msra.mxu0 %v52
  %58 = vmatpush.msra.mxu0 %v51
  %59 = vmatpush.msra.mxu0 %v50
  %60 = vmatpush.msra.mxu0 %v49
  %61 = vmatpush.msra.mxu0 %v48
  %62 = vmatpush.msra.mxu0 %v47
  %63 = vmatpush.msra.mxu0 %v46
  %64 = vmatpush.msra.mxu0 %v45
  %65 = vmatpush.msra.mxu0 %v44
  %66 = vmatpush.msra.mxu0 %v43
  %67 = vmatpush.msra.mxu0 %v42
  %68 = vmatpush.msra.mxu0 %v41
  %69 = vmatpush.msra.mxu0 %v40
  %70 = vmatpush.msra.mxu0 %v39
  %71 = vmatpush.msra.mxu0 %v38
  %72 = vmatpush.msra.mxu0 %v37
  %73 = vmatmul.f32.gmra.mxu0 %v35
  %v74 = vpop.f32.mrf.mxu0
  %v75 = vadd.f32 %v55, %v74
  %76 = vmatmul.f32.gmra.mxu0 %v36
  %v77 = vpop.f32.mrf.mxu0
  %v78 = vadd.f32 %v55, %v77
  %79 = vdwg.mxu0
  %v80 = vxor.u32 %v75, 2147483648
  %v81 = vxor.u32 %v78, 2147483648
  %v82 = vmul.f32 %v80, 1.442695
  %v83 = vpow.pop %v82
  %v84 = vmul.f32 %v81, 1.442695
  %v85 = vpow.pop %v84
  %v86 = vadd.f32 %v83, 1.0
  %v87 = vadd.f32 %v85, 1.0
  %v88 = vrcp.pop %v86
  %v89 = vmul.f32 %v86, %v88
  %v90 = vsub.f32 1.0, %v89
  %v91 = vmul.f32 %v88, %v90
  %v92 = vadd.f32 %v88, %v91
  %vm93 = vweird.f32 %v86
  %vm94 = vweird.f32 %v88
  %vm95 = vmor %vm93, %vm94
  %v96 = vsel %vm95, %v88, %v92
  %v97 = vand.u32 2147483647, %v86
  %vm98 = vcmp.eq.f32.partialorder %v97, 8.507059e+37
  %v99 = vand.u32 %v86, 2147483648
  %v100 = vor.u32 1.1754944e-38, %v99
  %v101 = vsel %vm98, %v100, %v96
  %v102 = vmul.f32 1.0, %v101
  %v103 = vrcp.pop %v87
  %v104 = vmul.f32 %v87, %v103
  %v105 = vsub.f32 1.0, %v104
  %v106 = vmul.f32 %v103, %v105
  %v107 = vadd.f32 %v103, %v106
  %vm108 = vweird.f32 %v87
  %vm109 = vweird.f32 %v103
  %vm110 = vmor %vm108, %vm109
  %v111 = vsel %vm110, %v103, %v107
  %v112 = vand.u32 2147483647, %v87
  %vm113 = vcmp.eq.f32.partialorder %v112, 8.507059e+37
  %v114 = vand.u32 %v87, 2147483648
  %v115 = vor.u32 1.1754944e-38, %v114
  %v116 = vsel %vm113, %v115, %v111
  %v117 = vmul.f32 1.0, %v116
  %v118 = vld [vmem:[%s4] sm:$0xff]
  %v119 = vld [vmem:[%s4 + $0x8] sm:$0xff]
  %v120 = vld [vmem:[%s4 + $0x10] sm:$0xff]
  %v121 = vld [vmem:[%s4 + $0x18] sm:$0xff]
  %v122 = vld [vmem:[%s4 + $0x20] sm:$0xff]
  %v123 = vld [vmem:[%s4 + $0x28] sm:$0xff]
  %v124 = vld [vmem:[%s4 + $0x30] sm:$0xff]
  %v125 = vld [vmem:[%s4 + $0x38] sm:$0xff]
  %v126 = vld [vmem:[%s4 + $0x40] sm:$0xff]
  %v127 = vld [vmem:[%s4 + $0x48] sm:$0xff]
  %v128 = vld [vmem:[%s4 + $0x50] sm:$0xff]
  %v129 = vld [vmem:[%s4 + $0x58] sm:$0xff]
  %v130 = vld [vmem:[%s4 + $0x60] sm:$0xff]
  %v131 = vld [vmem:[%s4 + $0x68] sm:$0xff]
  %v132 = vld [vmem:[%s4 + $0x70] sm:$0xff]
  %v133 = vld [vmem:[%s4 + $0x78] sm:$0xff]
  %v134 = vld [vmem:[%s5] sm:$0x3]
  %v136 = vperm.slane %v134, 0
  %v137 = vperm.slane %v134, 1
  %vm140 = vcmask 523264
  %v142 = vsel %vm140, %v102, 0
  %v145 = vsel %vm140, %v117, 0
  %147 = vmatpush.msra.mxu0 0.0
  %148 = vmatpush.msra.mxu0 0.0
  %149 = vmatpush.msra.mxu0 0.0
  %150 = vmatpush.msra.mxu0 0.0
  %151 = vmatpush.msra.mxu0 0.0
  %152 = vmatpush.msra.mxu0 0.0
  %153 = vmatpush.msra.mxu0 0.0
  %154 = vmatpush.msra.mxu0 0.0
  %155 = vmatpush.msra.mxu0 %v132
  %156 = vmatpush.msra.mxu0 %v130
  %157 = vmatpush.msra.mxu0 %v128
  %158 = vmatpush.msra.mxu0 %v126
  %159 = vmatpush.msra.mxu0 %v124
  %160 = vmatpush.msra.mxu0 %v122
  %161 = vmatpush.msra.mxu0 %v120
  %162 = vmatpush.msra.mxu0 %v118
  %163 = vmatmul.f32.gmra.mxu0 %v142
  %v164 = vpop.f32.mrf.mxu0
  %v165 = vadd.f32 %v136, %v164
  %166 = vmatmul.f32.gmra.mxu0 %v145
  %v167 = vpop.f32.mrf.mxu0
  %v168 = vadd.f32 %v136, %v167
  %169 = vdwg.mxu0
  %170 = vmatpush.msra.mxu0 0.0
  %171 = vmatpush.msra.mxu0 0.0
  %172 = vmatpush.msra.mxu0 0.0
  %173 = vmatpush.msra.mxu0 0.0
  %174 = vmatpush.msra.mxu0 0.0
  %175 = vmatpush.msra.mxu0 0.0
  %176 = vmatpush.msra.mxu0 0.0
  %177 = vmatpush.msra.mxu0 0.0
  %178 = vmatpush.msra.mxu0 %v133
  %179 = vmatpush.msra.mxu0 %v131
  %180 = vmatpush.msra.mxu0 %v129
  %181 = vmatpush.msra.mxu0 %v127
  %182 = vmatpush.msra.mxu0 %v125
  %183 = vmatpush.msra.mxu0 %v123
  %184 = vmatpush.msra.mxu0 %v121
  %185 = vmatpush.msra.mxu0 %v119
  %186 = vmatmul.f32.gmra.mxu0 %v142
  %v187 = vpop.f32.mrf.mxu0
  %v188 = vadd.f32 %v137, %v187
  %189 = vmatmul.f32.gmra.mxu0 %v145
  %v190 = vpop.f32.mrf.mxu0
  %v191 = vadd.f32 %v137, %v190
  %192 = vdwg.mxu0
  %v193 = vxor.u32 %v165, 2147483648
  %v194 = vxor.u32 %v188, 2147483648
  %v195 = vxor.u32 %v168, 2147483648
  %v196 = vxor.u32 %v191, 2147483648
  %v197 = vmul.f32 %v193, 1.442695
  %v198 = vpow.pop %v197
  %v199 = vmul.f32 %v194, 1.442695
  %v200 = vpow.pop %v199
  %v201 = vmul.f32 %v195, 1.442695
  %v202 = vpow.pop %v201
  %v203 = vmul.f32 %v196, 1.442695
  %v204 = vpow.pop %v203
  %v205 = vadd.f32 %v198, 1.0
  %v206 = vadd.f32 %v200, 1.0
  %v207 = vadd.f32 %v202, 1.0
  %v208 = vadd.f32 %v204, 1.0
  %v209 = vrcp.pop %v205
  %v210 = vmul.f32 %v205, %v209
  %v211 = vsub.f32 1.0, %v210
  %v212 = vmul.f32 %v209, %v211
  %v213 = vadd.f32 %v209, %v212
  %vm214 = vweird.f32 %v205
  %vm215 = vweird.f32 %v209
  %vm216 = vmor %vm214, %vm215
  %v217 = vsel %vm216, %v209, %v213
  %v218 = vand.u32 2147483647, %v205
  %vm219 = vcmp.eq.f32.partialorder %v218, 8.507059e+37
  %v220 = vand.u32 %v205, 2147483648
  %v221 = vor.u32 1.1754944e-38, %v220
  %v222 = vsel %vm219, %v221, %v217
  %v223 = vmul.f32 1.0, %v222
  %v224 = vrcp.pop %v206
  %v225 = vmul.f32 %v206, %v224
  %v226 = vsub.f32 1.0, %v225
  %v227 = vmul.f32 %v224, %v226
  %v228 = vadd.f32 %v224, %v227
  %vm229 = vweird.f32 %v206
  %vm230 = vweird.f32 %v224
  %vm231 = vmor %vm229, %vm230
  %v232 = vsel %vm231, %v224, %v228
  %v233 = vand.u32 2147483647, %v206
  %vm234 = vcmp.eq.f32.partialorder %v233, 8.507059e+37
  %v235 = vand.u32 %v206, 2147483648
  %v236 = vor.u32 1.1754944e-38, %v235
  %v237 = vsel %vm234, %v236, %v232
  %v238 = vmul.f32 1.0, %v237
  %v239 = vrcp.pop %v207
  %v240 = vmul.f32 %v207, %v239
  %v241 = vsub.f32 1.0, %v240
  %v242 = vmul.f32 %v239, %v241
  %v243 = vadd.f32 %v239, %v242
  %vm244 = vweird.f32 %v207
  %vm245 = vweird.f32 %v239
  %vm246 = vmor %vm244, %vm245
  %v247 = vsel %vm246, %v239, %v243
  %v248 = vand.u32 2147483647, %v207
  %vm249 = vcmp.eq.f32.partialorder %v248, 8.507059e+37
  %v250 = vand.u32 %v207, 2147483648
  %v251 = vor.u32 1.1754944e-38, %v250
  %v252 = vsel %vm249, %v251, %v247
  %v253 = vmul.f32 1.0, %v252
  %v254 = vrcp.pop %v208
  %v255 = vmul.f32 %v208, %v254
  %v256 = vsub.f32 1.0, %v255
  %v257 = vmul.f32 %v254, %v256
  %v258 = vadd.f32 %v254, %v257
  %vm259 = vweird.f32 %v208
  %vm260 = vweird.f32 %v254
  %vm261 = vmor %vm259, %vm260
  %v262 = vsel %vm261, %v254, %v258
  %v263 = vand.u32 2147483647, %v208
  %vm264 = vcmp.eq.f32.partialorder %v263, 8.507059e+37
  %v265 = vand.u32 %v208, 2147483648
  %v266 = vor.u32 1.1754944e-38, %v265
  %v267 = vsel %vm264, %v266, %v262
  %v268 = vmul.f32 1.0, %v267
  %v269 = vld [vmem:[%s6] sm:$0xff]
  %v270 = vld [vmem:[%s6 + $0x8] sm:$0xff]
  %v271 = vld [vmem:[%s6 + $0x10] sm:$0xff]
  %v272 = vld [vmem:[%s6 + $0x18] sm:$0xff]
  %v273 = vld [vmem:[%s6 + $0x20] sm:$0xff]
  %v274 = vld [vmem:[%s6 + $0x28] sm:$0xff]
  %v275 = vld [vmem:[%s6 + $0x30] sm:$0xff]
  %v276 = vld [vmem:[%s6 + $0x38] sm:$0xff]
  %v277 = vld [vmem:[%s6 + $0x40] sm:$0xff]
  %v278 = vld [vmem:[%s6 + $0x48] sm:$0xff]
  %v279 = vld [vmem:[%s6 + $0x50] sm:$0xff]
  %v280 = vld [vmem:[%s6 + $0x58] sm:$0xff]
  %v281 = vld [vmem:[%s6 + $0x60] sm:$0xff]
  %v282 = vld [vmem:[%s6 + $0x68] sm:$0xff]
  %v283 = vld [vmem:[%s6 + $0x70] sm:$0xff]
  %v284 = vld [vmem:[%s6 + $0x78] sm:$0xff]
  %v285 = vld [vmem:[%s6 + $0x80] sm:$0xff]
  %v286 = vld [vmem:[%s6 + $0x88] sm:$0xff]
  %v287 = vld [vmem:[%s6 + $0x90] sm:$0xff]
  %v288 = vld [vmem:[%s6 + $0x98] sm:$0xff]
  %v289 = vld [vmem:[%s6 + $0xa0] sm:$0xff]
  %v290 = vld [vmem:[%s6 + $0xa8] sm:$0xff]
  %v291 = vld [vmem:[%s6 + $0xb0] sm:$0xff]
  %v292 = vld [vmem:[%s6 + $0xb8] sm:$0xff]
  %v293 = vld [vmem:[%s6 + $0xc0] sm:$0xff]
  %v294 = vld [vmem:[%s6 + $0xc8] sm:$0xff]
  %v295 = vld [vmem:[%s6 + $0xd0] sm:$0xff]
  %v296 = vld [vmem:[%s6 + $0xd8] sm:$0xff]
  %v297 = vld [vmem:[%s6 + $0xe0] sm:$0xff]
  %v298 = vld [vmem:[%s6 + $0xe8] sm:$0xff]
  %v299 = vld [vmem:[%s6 + $0xf0] sm:$0xff]
  %v300 = vld [vmem:[%s6 + $0xf8] sm:$0xff]
  %v301 = vld [vmem:[%s7] sm:$0x1]
  %v303 = vperm.slane %v301, 0
  %305 = vmatpush.msra.mxu0 %v284
  %306 = vmatpush.msra.mxu0 %v283
  %307 = vmatpush.msra.mxu0 %v282
  %308 = vmatpush.msra.mxu0 %v281
  %309 = vmatpush.msra.mxu0 %v280
  %310 = vmatpush.msra.mxu0 %v279
  %311 = vmatpush.msra.mxu0 %v278
  %312 = vmatpush.msra.mxu0 %v277
  %313 = vmatpush.msra.mxu0 %v276
  %314 = vmatpush.msra.mxu0 %v275
  %315 = vmatpush.msra.mxu0 %v274
  %316 = vmatpush.msra.mxu0 %v273
  %317 = vmatpush.msra.mxu0 %v272
  %318 = vmatpush.msra.mxu0 %v271
  %319 = vmatpush.msra.mxu0 %v270
  %320 = vmatpush.msra.mxu0 %v269
  %321 = vmatmul.f32.gmra.mxu0 %v223
  %v322 = vpop.f32.mrf.mxu0
  %v323 = vadd.f32 %v303, %v322
  %324 = vmatmul.f32.gmra.mxu0 %v253
  %v325 = vpop.f32.mrf.mxu0
  %v326 = vadd.f32 %v303, %v325
  %327 = vdwg.mxu0
  %328 = vmatpush.msra.mxu0 %v300
  %329 = vmatpush.msra.mxu0 %v299
  %330 = vmatpush.msra.mxu0 %v298
  %331 = vmatpush.msra.mxu0 %v297
  %332 = vmatpush.msra.mxu0 %v296
  %333 = vmatpush.msra.mxu0 %v295
  %334 = vmatpush.msra.mxu0 %v294
  %335 = vmatpush.msra.mxu0 %v293
  %336 = vmatpush.msra.mxu0 %v292
  %337 = vmatpush.msra.mxu0 %v291
  %338 = vmatpush.msra.mxu0 %v290
  %339 = vmatpush.msra.mxu0 %v289
  %340 = vmatpush.msra.mxu0 %v288
  %341 = vmatpush.msra.mxu0 %v287
  %342 = vmatpush.msra.mxu0 %v286
  %343 = vmatpush.msra.mxu0 %v285
  %344 = vmatmul.f32.gmra.mxu0 %v238
  %v345 = vpop.f32.mrf.mxu0
  %v346 = vadd.f32 %v323, %v345
  %347 = vmatmul.f32.gmra.mxu0 %v268
  %v348 = vpop.f32.mrf.mxu0
  %v349 = vadd.f32 %v326, %v348
  %350 = vdwg.mxu0
  %v351 = vxor.u32 %v346, 2147483648
  %v352 = vxor.u32 %v349, 2147483648
  %v353 = vmul.f32 %v351, 1.442695
  %v354 = vpow.pop %v353
  %v355 = vmul.f32 %v352, 1.442695
  %v356 = vpow.pop %v355
  %v357 = vadd.f32 %v354, 1.0
  %v358 = vadd.f32 %v356, 1.0
  %v359 = vrcp.pop %v357
  %v360 = vmul.f32 %v357, %v359
  %v361 = vsub.f32 1.0, %v360
  %v362 = vmul.f32 %v359, %v361
  %v363 = vadd.f32 %v359, %v362
  %vm364 = vweird.f32 %v357
  %vm365 = vweird.f32 %v359
  %vm366 = vmor %vm364, %vm365
  %v367 = vsel %vm366, %v359, %v363
  %v368 = vand.u32 2147483647, %v357
  %vm369 = vcmp.eq.f32.partialorder %v368, 8.507059e+37
  %v370 = vand.u32 %v357, 2147483648
  %v371 = vor.u32 1.1754944e-38, %v370
  %v372 = vsel %vm369, %v371, %v367
  %v373 = vmul.f32 1.0, %v372
  %v374 = vrcp.pop %v358
  %v375 = vmul.f32 %v358, %v374
  %v376 = vsub.f32 1.0, %v375
  %v377 = vmul.f32 %v374, %v376
  %v378 = vadd.f32 %v374, %v377
  %vm379 = vweird.f32 %v358
  %vm380 = vweird.f32 %v374
  %vm381 = vmor %vm379, %vm380
  %v382 = vsel %vm381, %v374, %v378
  %v383 = vand.u32 2147483647, %v358
  %vm384 = vcmp.eq.f32.partialorder %v383, 8.507059e+37
  %v385 = vand.u32 %v358, 2147483648
  %v386 = vor.u32 1.1754944e-38, %v385
  %v387 = vsel %vm384, %v386, %v382
  %v388 = vmul.f32 1.0, %v387
  %v389 = vld [vmem:[%s8] sm:$0xff]
  %v390 = vld [vmem:[%s8 + $0x8] sm:$0xff]
  %v391 = vld [vmem:[%s8 + $0x10] sm:$0xff]
  %v392 = vld [vmem:[%s8 + $0x18] sm:$0xff]
  %v393 = vld [vmem:[%s8 + $0x20] sm:$0xff]
  %v394 = vld [vmem:[%s8 + $0x28] sm:$0xff]
  %v395 = vld [vmem:[%s8 + $0x30] sm:$0xff]
  %v396 = vld [vmem:[%s8 + $0x38] sm:$0xff]
  %v397 = vld [vmem:[%s9] sm:$0x1]
  %v399 = vperm.slane %v397, 0
  %v402 = vsel %vm140, %v373, 0
  %v405 = vsel %vm140, %v388, 0
  %407 = vmatpush.msra.mxu0 0.0
  %408 = vmatpush.msra.mxu0 0.0
  %409 = vmatpush.msra.mxu0 0.0
  %410 = vmatpush.msra.mxu0 0.0
  %411 = vmatpush.msra.mxu0 0.0
  %412 = vmatpush.msra.mxu0 0.0
  %413 = vmatpush.msra.mxu0 0.0
  %414 = vmatpush.msra.mxu0 0.0
  %415 = vmatpush.msra.mxu0 %v396
  %416 = vmatpush.msra.mxu0 %v395
  %417 = vmatpush.msra.mxu0 %v394
  %418 = vmatpush.msra.mxu0 %v393
  %419 = vmatpush.msra.mxu0 %v392
  %420 = vmatpush.msra.mxu0 %v391
  %421 = vmatpush.msra.mxu0 %v390
  %422 = vmatpush.msra.mxu0 %v389
  %423 = vmatmul.f32.gmra.mxu0 %v402
  %v424 = vpop.f32.mrf.mxu0
  %v425 = vadd.f32 %v399, %v424
  %426 = vmatmul.f32.gmra.mxu0 %v405
  %v427 = vpop.f32.mrf.mxu0
  %v428 = vadd.f32 %v399, %v427
  %429 = vdwg.mxu0
  %v430 = vsub.f32 %v425, %v428
  %v431 = vadd.f32 %v430, 1e-06
  %v432 = vlaneseq
  %v433 = vand.u32 %v432, 127
  %vm434 = vcmp.lt.s32.totalorder %v433, 25
  %v435 = vmul.f32 %v431, %v431
  %v436 = vsel %vm434, %v435, 0.0
  %437 = vadd.xlane.f32.xlu0 %v436
  %v438 = vpop.xlane.xlu0 %437
  %v439 = vrsqrt.pop %v438
  %v440 = vmul.f32 %v439, %v438
  %v441 = vmul.f32 %v440, %v439
  %v442 = vmul.f32 0.5, %v441
  %v443 = vsub.f32 1.5, %v442
  %v444 = vmul.f32 %v439, %v443
  %v445 = vmul.f32 %v438, %v444
  %vm446 = vcmp.eq.f32.partialorder %v438, inf
  %v447 = vsel %vm446, %v438, %v445
  %vm448 = vcmp.eq.f32.partialorder %v438, 0.0
  %v449 = vand.u32 %v438, 2147483648
  %v450 = vsel %vm448, %v449, %v447
  %451 = vst [vmem:[%s10] sm:$0xff] %v450
  // Predicated region
  $region42: #{siamese_forward.1} parent=0 // pred_check
    _
  $region43: #{siamese_forward.1} parent=0 // pred_check_branch
    %453 = sbr.rel (0) target = $region45
  $region44: #{siamese_forward.1} parent=0 // pred_region
    _
  $region45: #{siamese_forward.1} parent=0 // pred_fallthru
    _
  // Predicated region
  $region46: #{siamese_forward.1} parent=0 // pred_check
    _
  $region47: #{siamese_forward.1} parent=0 // pred_check_branch
    %455 = sbr.rel (0) target = $region49
  $region48: #{siamese_forward.1} parent=0 // pred_region
    _
  $region49: #{siamese_forward.1} parent=0 // pred_fallthru
    _

</llo_original>
